<compile_context>
chip_gen: v5e
topology: v5e:2x2
jax: 0.10.0
libtpu: 0.0.40
codegen_flags: <defaults>
</compile_context>

<pallas_src>
import jax
import jax.numpy as jnp
from jax.experimental import pallas as pl
from jax.experimental.pallas import tpu as pltpu


def single_head_forward(x_nchw, conv_w, conv_b, fc_w, fc_b, *, tile_s=None):
    """Forward pass of SingleHead.  Returns logits[:, 0], shape (B,)."""
    B, C, H, W = x_nchw.shape
    F_out, _, KH, KW = conv_w.shape
    HW = H * W
    CK = C * KH * KW
    CK_pad = ((CK + 31) // 32) * 32          # pad contraction dim to x32

    # spatial tile (rows of the im2col matrix handled per grid step)
    if tile_s is None:
        tile_s = 2048
    tile_s = min(tile_s, HW)
    n_s = -(-HW // tile_s)                   # ceil-div
    HW_pad = n_s * tile_s
    needs_mask = HW_pad != HW
    inv_hw = 1.0 / float(HW)

    # ---- glue: im2col unfold (stride 1, SAME padding), in bf16 ----
    ph, pw = KH // 2, KW // 2
    xb = x_nchw.astype(jnp.bfloat16)
    xpad = jnp.pad(xb, ((0, 0), (0, 0), (ph, ph), (pw, pw)))
    patches = jnp.stack(
        [xpad[:, :, kh:kh + H, kw:kw + W] for kh in range(KH) for kw in range(KW)],
        axis=2,
    )                                              # (B, C, KH*KW, H, W)
    patches = patches.transpose(0, 3, 4, 1, 2).reshape(B, HW, CK)
    patches = jnp.pad(patches, ((0, 0), (0, HW_pad - HW), (0, CK_pad - CK)))

    w_mat = conv_w.reshape(F_out, CK).T.astype(jnp.bfloat16)   # (CK, F)
    w_mat = jnp.pad(w_mat, ((0, CK_pad - CK), (0, 0)))         # (CK_pad, F)

    cb = conv_b.reshape(1, F_out).astype(jnp.float32)
    fcw0 = fc_w[0:1].astype(jnp.float32)                       # (1, F): row 0 only
    fcb0 = fc_b[0:1].reshape(1, 1).astype(jnp.float32)         # (1, 1)

    # ---- fused Pallas kernel: conv-matmul + relu + GAP-accumulate + fc ----
    def fused_kernel(p_ref, w_ref, cb_ref, fcw_ref, fcb_ref, o_ref, acc_ref):
        s = pl.program_id(1)

        @pl.when(s == 0)
        def _init():
            acc_ref[...] = jnp.zeros_like(acc_ref)

        # conv-as-matmul + bias + relu on this (tile_s, CK_pad) patch tile
        feats = jnp.dot(p_ref[0], w_ref[...],
                        preferred_element_type=jnp.float32)      # (tile_s, F)
        feats = jnp.maximum(feats + cb_ref[...], 0.0)

        if needs_mask:
            row = s * tile_s + jax.lax.broadcasted_iota(
                jnp.int32, (tile_s, 1), 0)
            feats = jnp.where(row < HW, feats, 0.0)

        # global-average-pool partial sum
        acc_ref[...] += jnp.sum(feats, axis=0, keepdims=True)    # (1, F)

        @pl.when(s == pl.num_programs(1) - 1)
        def _finalize():
            pooled = acc_ref[...] * inv_hw                       # (1, F)
            # dropout: inference mode (model.eval()) -> identity
            logit = jnp.sum(pooled * fcw_ref[...], axis=-1,
                            keepdims=True) + fcb_ref[...]        # (1, 1)
            o_ref[...] = jnp.broadcast_to(logit, o_ref.shape).astype(o_ref.dtype)

    out = pl.pallas_call(
        fused_kernel,
        out_shape=jax.ShapeDtypeStruct((B, 8, 128), jnp.float32),
        grid_spec=pltpu.PrefetchScalarGridSpec(
            num_scalar_prefetch=0,
            grid=(B, n_s),
            in_specs=[
                pl.BlockSpec((1, tile_s, CK_pad), lambda b, s: (b, s, 0)),
                pl.BlockSpec((CK_pad, F_out), lambda b, s: (0, 0)),
                pl.BlockSpec((1, F_out), lambda b, s: (0, 0)),
                pl.BlockSpec((1, F_out), lambda b, s: (0, 0)),
                pl.BlockSpec((1, 1), lambda b, s: (0, 0)),
            ],
            out_specs=pl.BlockSpec((1, 8, 128), lambda b, s: (b, 0, 0)),
            scratch_shapes=[pltpu.VMEM((1, F_out), jnp.float32)],
        ),
        compiler_params=pltpu.CompilerParams(
            dimension_semantics=("parallel", "arbitrary"),
            vmem_limit_bytes=32 * 1024 * 1024,
        ),
    )(patches, w_mat, cb, fcw0, fcb0)

    # forward() returns self.fc(x)[:, 0]; the kernel already computed only
    # column 0, broadcast across a lane-dense (8, 128) slab.
    return out[:, 0, 0]


def _reference(x_nchw, conv_w, conv_b, fc_w, fc_b):
    """Pure-JAX f32 reference (lax conv) for correctness check."""
    y = jax.lax.conv_general_dilated(
        x_nchw, conv_w, window_strides=(1, 1), padding="SAME",
        dimension_numbers=("NCHW", "OIHW", "NCHW"))
    y = jnp.maximum(y + conv_b[None, :, None, None], 0.0)
    pooled = jnp.mean(y, axis=(2, 3))                   # (B, F)
    logits = pooled @ fc_w.T + fc_b                     # (B, num_classes)
    return logits[:, 0]


if __name__ == "__main__":
    B, C, H, W = 2, 3, 16, 16        # num_input_channels=3 (module default)
    dim_feats = 32
    num_classes = 2

    key = jax.random.PRNGKey(0)
    k_x, k_cw, k_cb, k_fw, k_fb = jax.random.split(key, 5)

    x = jax.random.normal(k_x, (B, C, H, W), dtype=jnp.float32)
    conv_w = jax.random.normal(k_cw, (dim_feats, C, 3, 3), dtype=jnp.float32) * 0.1
    conv_b = jax.random.normal(k_cb, (dim_feats,), dtype=jnp.float32) * 0.1
    fc_w = jax.random.normal(k_fw, (num_classes, dim_feats), dtype=jnp.float32) * 0.1
    fc_b = jax.random.normal(k_fb, (num_classes,), dtype=jnp.float32) * 0.1

    # tile_s=64 -> grid (B, 4): exercises accumulator init/accumulate/finalize.
    fwd = jax.jit(lambda *a: single_head_forward(*a, tile_s=64))
    out = jax.block_until_ready(fwd(x, conv_w, conv_b, fc_w, fc_b))

    ref = _reference(x, conv_w, conv_b, fc_w, fc_b)
    assert out.shape == (B,), out.shape
    # bf16 MXU inputs with f32 accumulation -> ~1e-3 absolute error expected.
    assert jnp.allclose(out, ref, atol=2e-2, rtol=2e-2), (out, ref)

    print("KERNEL_OK")
</pallas_src>

<mosaic_0001>
module attributes {stable_mosaic.version = 11 : i64} {
  func.func @fused_kernel(%arg0: i32, %arg1: i32, %arg2: memref<1x64x32xbf16, #tpu.memory_space<vmem>>, %arg3: memref<32x32xbf16, #tpu.memory_space<vmem>>, %arg4: memref<1x32xf32, #tpu.memory_space<vmem>>, %arg5: memref<1x32xf32, #tpu.memory_space<vmem>>, %arg6: memref<1x1xf32, #tpu.memory_space<vmem>>, %arg7: memref<1x8x128xf32, #tpu.memory_space<vmem>>, %arg8: memref<1x32xf32, #tpu.memory_space<vmem>>) attributes {dimension_semantics = [#tpu.dimension_semantics<parallel>, #tpu.dimension_semantics<arbitrary>], iteration_bounds = array<i64: 2, 4>, scalar_prefetch = 0 : i64, scratch_operands = 1 : i64, tpu.core_type = #tpu.core_type<tc>, window_params = [{transform_indices = @transform_0, window_bounds = array<i64: 1, 64, 32>}, {pipeline_mode = #tpu.pipeline_mode<synchronous>, transform_indices = @transform_1, window_bounds = array<i64: 32, 32>}, {pipeline_mode = #tpu.pipeline_mode<synchronous>, transform_indices = @transform_2, window_bounds = array<i64: 1, 32>}, {pipeline_mode = #tpu.pipeline_mode<synchronous>, transform_indices = @transform_3, window_bounds = array<i64: 1, 32>}, {pipeline_mode = #tpu.pipeline_mode<synchronous>, transform_indices = @transform_4, window_bounds = array<i64: 1, 1>}, {transform_indices = @transform_5, window_bounds = array<i64: 1, 8, 128>}]} {
    %c0_i32 = arith.constant 0 : i32
    %0 = arith.cmpi eq, %arg1, %c0_i32 : i32
    %1 = arith.extui %0 : i1 to i32
    %c0_i32_0 = arith.constant 0 : i32
    %2 = arith.cmpi ne, %1, %c0_i32_0 : i32
    scf.if %2 {
      %cst_14 = arith.constant 0.000000e+00 : f32
      %20 = vector.broadcast %cst_14 : f32 to vector<1x32xf32>
      %c0_15 = arith.constant 0 : index
      %c0_16 = arith.constant 0 : index
      %21 = vector.load %arg8[%c0_15, %c0_16] : memref<1x32xf32, #tpu.memory_space<vmem>>, vector<1x32xf32>
      tpu.vector_store %arg8[%c0_15, %c0_16], %20 {strides = array<i32>} : memref<1x32xf32, #tpu.memory_space<vmem>>, vector<1x32xf32>,
    } else {
    }
    %c0 = arith.constant 0 : index
    %c0_1 = arith.constant 0 : index
    %c0_2 = arith.constant 0 : index
    %3 = vector.load %arg2[%c0, %c0_1, %c0_2] : memref<1x64x32xbf16, #tpu.memory_space<vmem>>, vector<1x64x32xbf16>
    %4 = vector.shape_cast %3 : vector<1x64x32xbf16> to vector<64x32xbf16>
    %c0_3 = arith.constant 0 : index
    %c0_4 = arith.constant 0 : index
    %5 = vector.load %arg3[%c0_3, %c0_4] : memref<32x32xbf16, #tpu.memory_space<vmem>>, vector<32x32xbf16>
    %cst = arith.constant dense<0.000000e+00> : vector<64x32xf32>
    %6 = tpu.matmul %4, %5, %cst {dimension_numbers = #tpu.dot_dimension_numbers<[1], [0], [0], [1], [0, 0, 1, 1], [], []>} : vector<64x32xbf16>, vector<32x32xbf16>, vector<64x32xf32> -> vector<64x32xf32>
    %c0_5 = arith.constant 0 : index
    %c0_6 = arith.constant 0 : index
    %7 = vector.load %arg4[%c0_5, %c0_6] : memref<1x32xf32, #tpu.memory_space<vmem>>, vector<1x32xf32>
    %8 = vector.broadcast %7 : vector<1x32xf32> to vector<64x32xf32>
    %9 = arith.addf %6, %8 : vector<64x32xf32>
    %cst_7 = arith.constant 0.000000e+00 : f32
    %10 = vector.broadcast %cst_7 : f32 to vector<64x32xf32>
    %11 = arith.maximumf %9, %10 : vector<64x32xf32>
    %c0_8 = arith.constant 0 : index
    %c0_9 = arith.constant 0 : index
    %12 = vector.load %arg8[%c0_8, %c0_9] : memref<1x32xf32, #tpu.memory_space<vmem>>, vector<1x32xf32>
    %cst_10 = arith.constant dense<0.000000e+00> : vector<32xf32>
    %13 = vector.multi_reduction <add>, %11, %cst_10 [0] : vector<64x32xf32> to vector<32xf32>
    %14 = vector.shape_cast %13 : vector<32xf32> to vector<1x32xf32>
    %15 = arith.addf %12, %14 : vector<1x32xf32>
    %c0_11 = arith.constant 0 : index
    %c0_12 = arith.constant 0 : index
    %16 = vector.load %arg8[%c0_11, %c0_12] : memref<1x32xf32, #tpu.memory_space<vmem>>, vector<1x32xf32>
    tpu.vector_store %arg8[%c0_11, %c0_12], %15 {strides = array<i32>} : memref<1x32xf32, #tpu.memory_space<vmem>>, vector<1x32xf32>,
    %c3_i32 = arith.constant 3 : i32
    %17 = arith.cmpi eq, %arg1, %c3_i32 : i32
    %18 = arith.extui %17 : i1 to i32
    %c0_i32_13 = arith.constant 0 : i32
    %19 = arith.cmpi ne, %18, %c0_i32_13 : i32
    scf.if %19 {
      %c0_14 = arith.constant 0 : index
      %c0_15 = arith.constant 0 : index
      %20 = vector.load %arg8[%c0_14, %c0_15] : memref<1x32xf32, #tpu.memory_space<vmem>>, vector<1x32xf32>
      %cst_16 = arith.constant 3.906250e-03 : f32
      %21 = vector.broadcast %cst_16 : f32 to vector<1x32xf32>
      %22 = arith.mulf %20, %21 : vector<1x32xf32>
      %c0_17 = arith.constant 0 : index
      %c0_18 = arith.constant 0 : index
      %23 = vector.load %arg5[%c0_17, %c0_18] : memref<1x32xf32, #tpu.memory_space<vmem>>, vector<1x32xf32>
      %24 = arith.mulf %22, %23 : vector<1x32xf32>
      %cst_19 = arith.constant dense<0.000000e+00> : vector<1xf32>
      %25 = vector.multi_reduction <add>, %24, %cst_19 [1] : vector<1x32xf32> to vector<1xf32>
      %26 = vector.shape_cast %25 : vector<1xf32> to vector<1x1xf32>
      %c0_20 = arith.constant 0 : index
      %c0_21 = arith.constant 0 : index
      %27 = vector.load %arg6[%c0_20, %c0_21] : memref<1x1xf32, #tpu.memory_space<vmem>>, vector<1x1xf32>
      %28 = arith.addf %26, %27 : vector<1x1xf32>
      %29 = vector.shape_cast %28 : vector<1x1xf32> to vector<1x1x1xf32>
      %30 = vector.broadcast %29 : vector<1x1x1xf32> to vector<1x8x128xf32>
      %c0_22 = arith.constant 0 : index
      %c0_23 = arith.constant 0 : index
      %c0_24 = arith.constant 0 : index
      %31 = vector.load %arg7[%c0_22, %c0_23, %c0_24] : memref<1x8x128xf32, #tpu.memory_space<vmem>>, vector<1x8x128xf32>
      tpu.vector_store %arg7[%c0_22, %c0_23, %c0_24], %30 {strides = array<i32>} : memref<1x8x128xf32, #tpu.memory_space<vmem>>, vector<1x8x128xf32>,
    } else {
    }
    return
  }
  func.func @transform_0(%arg0: i32, %arg1: i32) -> (i32, i32, i32) {
    %c0_i32 = arith.constant 0 : i32
    %c0_i32_0 = arith.constant 0 : i32
    return %arg0, %arg1, %c0_i32 : i32, i32, i32
  }
  func.func @transform_1(%arg0: i32, %arg1: i32) -> (i32, i32) {
    %c0_i32 = arith.constant 0 : i32
    %c0_i32_0 = arith.constant 0 : i32
    %c0_i32_1 = arith.constant 0 : i32
    return %c0_i32, %c0_i32_0 : i32, i32
  }
  func.func @transform_2(%arg0: i32, %arg1: i32) -> (i32, i32) {
    %c0_i32 = arith.constant 0 : i32
    %c0_i32_0 = arith.constant 0 : i32
    %c0_i32_1 = arith.constant 0 : i32
    return %c0_i32, %c0_i32_0 : i32, i32
  }
  func.func @transform_3(%arg0: i32, %arg1: i32) -> (i32, i32) {
    %c0_i32 = arith.constant 0 : i32
    %c0_i32_0 = arith.constant 0 : i32
    %c0_i32_1 = arith.constant 0 : i32
    return %c0_i32, %c0_i32_0 : i32, i32
  }
  func.func @transform_4(%arg0: i32, %arg1: i32) -> (i32, i32) {
    %c0_i32 = arith.constant 0 : i32
    %c0_i32_0 = arith.constant 0 : i32
    %c0_i32_1 = arith.constant 0 : i32
    return %c0_i32, %c0_i32_0 : i32, i32
  }
  func.func @transform_5(%arg0: i32, %arg1: i32) -> (i32, i32, i32) {
    %c0_i32 = arith.constant 0 : i32
    %c0_i32_0 = arith.constant 0 : i32
    %c0_i32_1 = arith.constant 0 : i32
    return %arg0, %c0_i32, %c0_i32_0 : i32, i32, i32
  }
}

</mosaic_0001>

<llo_original>
// kernel: _lambda_.1
$region0: #{_lambda_.1}
  #allocation0 [shape = 'u32[]', space=smem, size = 0x4, offset = 0x4, fixed_abs, tag = 'smem constant byte address 0x4 - core index']
  #allocation1 [shape = 'u32[72,128]{1,0:T(1,128)}', space=vmem, size = 0x9000, scoped, tag = 'internal scratch']
  #allocation2 [shape = 'f32[1,32]{1,0:T(1,128)}', space=vmem, size = 0x200, scoped, tag = 'scratch operand']
  #allocation3 [shape = 'f32[1,1]{1,0:T(1,128)S(1)}', space=vmem, size = 0x200, scoped, tag = 'scoped memory for _lambda_.1']
  %s0 = inlined_call_operand.vmem [shape: bf16[2,256,32], index: 0, kind: input, shape index: {}]
  %s1 = inlined_call_operand.vmem [shape: bf16[32,32], index: 1, kind: input, shape index: {}]
  %s2 = inlined_call_operand.vmem [shape: f32[1,32], index: 2, kind: input, shape index: {}]
  %s3 = inlined_call_operand.vmem [shape: f32[1,32], index: 3, kind: input, shape index: {}]
  %s4 = inlined_call_operand.<no memory space> [shape: f32[1,1], index: 4, kind: input, shape index: {}]
  %s5 = inlined_call_operand.vmem [shape: f32[2,8,128], index: 5, kind: output, shape index: {}]
  %s6 = sld [smem:[#allocation0]]
  $region61: #{_lambda_.1} parent=0
    _
  %s8 = ssub.s32 1, %s6
  %s9 = scalar_select 0, %s8, %s6
  %v10 = vstv %s4
  %11 = vst [vmem:[#allocation3] sm:$0x1] %v10
  loop: start=0, step=1, limit=10
  $region2: #{_lambda_.1} parent=0 // loop_pre_header
    _
  $region3: #{_lambda_.1} parent=0 // loop_header
    %s13 = sphi 0, %s17
    %p14 = scmp.ge.s32.totalorder %s13, 10
    %s20 = sphi 0, %s32
    %s21 = sphi 0, %s28
    %s22 = sphi 0, %s20
    %s23 = sphi 0, %s21
    %s24 = sphi 0, %s22
    %s25 = sphi 0, %s23
    %s37 = sphi 0, %s39
    %s40 = sphi 0, %s37
    %s41 = sphi 0, %s40
    %s57 = sphi 0, %s41
    %s61 = sphi 0, %s61
    %s63 = sphi 0, %s61
    %s64 = sphi 0, %s63
    %s78 = sphi 0, %s64
    %s82 = sphi 0, %s82
    %s84 = sphi 0, %s82
    %s85 = sphi 0, %s84
    %s99 = sphi 0, %s85
    %s103 = sphi 0, %s103
    %s105 = sphi 0, %s103
    %s106 = sphi 0, %s105
    %s120 = sphi 0, %s106
    %s124 = sphi 0, %s124
    %s126 = sphi 0, %s124
    %s127 = sphi 0, %s126
    %s141 = sphi 0, %s127
    %s147 = sphi 0, %s149
    %s150 = sphi 0, %s147
    %s151 = sphi 0, %s150
    %s167 = sphi 0, %s151
  $region4: #{_lambda_.1} parent=0 // loop_header_branch
    %16 = sbr.rel (%p14) target = $region8
  $region5: #{_lambda_.1} parent=0 // loop_body
    %s18 = ssub.s32 %s13, 1
    %s19 = ssub.s32 %s13, 2
    %s26 = sadd.s32 1, %s21
    %p27 = scmp.ge.s32.totalorder %s26, 4
    %s28 = scalar_select %p27, 0, %s26
    %s29 = sadd.s32 1, %s20
    %s30 = scalar_select %p27, %s29, %s20
    %p31 = scmp.ge.s32.totalorder %s30, 2
    %s32 = scalar_select %p31, 0, %s30
    %s33 = ssub.s32 %s20, %s32
    %s34 = ssub.s32 %s21, %s28
    %s35 = sor.u32 %s33, %s34
    %p36 = scmp.eq.s32.totalorder %s35, 0
    %s38 = sadd.s32 %s37, 1
    %s39 = scalar_select %p36, %s37, %s38
    %p42 = pneg %p36
    %p43 = scmp.eq.s32.totalorder %s13, 7
    %p44 = por %p42, %p43
    %p45 = scmp.ne.s32.totalorder %s37, %s40
    %p46 = scmp.eq.s32.totalorder %s13, 0
    %p47 = por %p45, %p46
    %p48 = scmp.ne.s32.totalorder %s37, %s40
    %p49 = scmp.eq.s32.totalorder %s18, 7
    %p50 = por %p48, %p49
    %p51 = scmp.ne.s32.totalorder %s40, %s41
    %p52 = scmp.eq.s32.totalorder %s18, 0
    %p53 = por %p51, %p52
    %p54 = scmp.ne.s32.totalorder %s40, %s41
    %p55 = scmp.eq.s32.totalorder %s19, 7
    %p56 = por %p54, %p55
    %p58 = scmp.ne.s32.totalorder %s41, %s57
    %p59 = scmp.eq.s32.totalorder %s19, 0
    %p60 = por %p58, %p59
    %s62 = sadd.s32 %s61, 1
    %p65 = scmp.eq.s32.totalorder %s13, 7
    %p66 = scmp.ne.s32.totalorder %s61, %s63
    %p67 = scmp.eq.s32.totalorder %s13, 0
    %p68 = por %p66, %p67
    %p69 = scmp.ne.s32.totalorder %s61, %s63
    %p70 = scmp.eq.s32.totalorder %s18, 7
    %p71 = por %p69, %p70
    %p72 = scmp.ne.s32.totalorder %s63, %s64
    %p73 = scmp.eq.s32.totalorder %s18, 0
    %p74 = por %p72, %p73
    %p75 = scmp.ne.s32.totalorder %s63, %s64
    %p76 = scmp.eq.s32.totalorder %s19, 7
    %p77 = por %p75, %p76
    %p79 = scmp.ne.s32.totalorder %s64, %s78
    %p80 = scmp.eq.s32.totalorder %s19, 0
    %p81 = por %p79, %p80
    %s83 = sadd.s32 %s82, 1
    %p86 = scmp.eq.s32.totalorder %s13, 7
    %p87 = scmp.ne.s32.totalorder %s82, %s84
    %p88 = scmp.eq.s32.totalorder %s13, 0
    %p89 = por %p87, %p88
    %p90 = scmp.ne.s32.totalorder %s82, %s84
    %p91 = scmp.eq.s32.totalorder %s18, 7
    %p92 = por %p90, %p91
    %p93 = scmp.ne.s32.totalorder %s84, %s85
    %p94 = scmp.eq.s32.totalorder %s18, 0
    %p95 = por %p93, %p94
    %p96 = scmp.ne.s32.totalorder %s84, %s85
    %p97 = scmp.eq.s32.totalorder %s19, 7
    %p98 = por %p96, %p97
    %p100 = scmp.ne.s32.totalorder %s85, %s99
    %p101 = scmp.eq.s32.totalorder %s19, 0
    %p102 = por %p100, %p101
    %s104 = sadd.s32 %s103, 1
    %p107 = scmp.eq.s32.totalorder %s13, 7
    %p108 = scmp.ne.s32.totalorder %s103, %s105
    %p109 = scmp.eq.s32.totalorder %s13, 0
    %p110 = por %p108, %p109
    %p111 = scmp.ne.s32.totalorder %s103, %s105
    %p112 = scmp.eq.s32.totalorder %s18, 7
    %p113 = por %p111, %p112
    %p114 = scmp.ne.s32.totalorder %s105, %s106
    %p115 = scmp.eq.s32.totalorder %s18, 0
    %p116 = por %p114, %p115
    %p117 = scmp.ne.s32.totalorder %s105, %s106
    %p118 = scmp.eq.s32.totalorder %s19, 7
    %p119 = por %p117, %p118
    %p121 = scmp.ne.s32.totalorder %s106, %s120
    %p122 = scmp.eq.s32.totalorder %s19, 0
    %p123 = por %p121, %p122
    %s125 = sadd.s32 %s124, 1
    %p128 = scmp.eq.s32.totalorder %s13, 7
    %p129 = scmp.ne.s32.totalorder %s124, %s126
    %p130 = scmp.eq.s32.totalorder %s13, 0
    %p131 = por %p129, %p130
    %p132 = scmp.ne.s32.totalorder %s124, %s126
    %p133 = scmp.eq.s32.totalorder %s18, 7
    %p134 = por %p132, %p133
    %p135 = scmp.ne.s32.totalorder %s126, %s127
    %p136 = scmp.eq.s32.totalorder %s18, 0
    %p137 = por %p135, %p136
    %p138 = scmp.ne.s32.totalorder %s126, %s127
    %p139 = scmp.eq.s32.totalorder %s19, 7
    %p140 = por %p138, %p139
    %p142 = scmp.ne.s32.totalorder %s127, %s141
    %p143 = scmp.eq.s32.totalorder %s19, 0
    %p144 = por %p142, %p143
    %s145 = ssub.s32 %s20, %s32
    %p146 = scmp.eq.s32.totalorder %s145, 0
    %s148 = sadd.s32 %s147, 1
    %s149 = scalar_select %p146, %s147, %s148
    %p152 = pneg %p146
    %p153 = scmp.eq.s32.totalorder %s13, 7
    %p154 = por %p152, %p153
    %p155 = scmp.ne.s32.totalorder %s147, %s150
    %p156 = scmp.eq.s32.totalorder %s13, 0
    %p157 = por %p155, %p156
    %p158 = scmp.ne.s32.totalorder %s147, %s150
    %p159 = scmp.eq.s32.totalorder %s18, 7
    %p160 = por %p158, %p159
    %p161 = scmp.ne.s32.totalorder %s150, %s151
    %p162 = scmp.eq.s32.totalorder %s18, 0
    %p163 = por %p161, %p162
    %p164 = scmp.ne.s32.totalorder %s150, %s151
    %p165 = scmp.eq.s32.totalorder %s19, 7
    %p166 = por %p164, %p165
    %p168 = scmp.ne.s32.totalorder %s151, %s167
    %p169 = scmp.eq.s32.totalorder %s19, 0
    %p170 = por %p168, %p169
    %p171 = scmp.le.s32.totalorder 1, %s13
    %p172 = scmp.lt.s32.totalorder %s13, 9
    %p173 = pnand %p171, %p172
    %p174 = pneg %p173
    // Predicated region
    $region9: #{_lambda_.1} parent=5 // pred_check
      _
    $region10: #{_lambda_.1} parent=5 // pred_check_branch
      %176 = sbr.rel (%p173) target = $region12
    $region11: #{_lambda_.1} parent=5 // pred_region
      %s177 = ssub.s32 %s13, 1
      // Predicated region
      $region13: #{_lambda_.1} parent=11 // pred_check
        %p178 = pneg %p74
      $region14: #{_lambda_.1} parent=11 // pred_check_branch
        %180 = sbr.rel (%p178) target = $region16
      $region15: #{_lambda_.1} parent=11 // pred_region
        _
      $region16: #{_lambda_.1} parent=11 // pred_fallthru
        _
      // Predicated region
      $region17: #{_lambda_.1} parent=11 // pred_check
        %p181 = pneg %p95
      $region18: #{_lambda_.1} parent=11 // pred_check_branch
        %183 = sbr.rel (%p181) target = $region20
      $region19: #{_lambda_.1} parent=11 // pred_region
        _
      $region20: #{_lambda_.1} parent=11 // pred_fallthru
        _
      // Predicated region
      $region21: #{_lambda_.1} parent=11 // pred_check
        %p184 = pneg %p116
      $region22: #{_lambda_.1} parent=11 // pred_check_branch
        %186 = sbr.rel (%p184) target = $region24
      $region23: #{_lambda_.1} parent=11 // pred_region
        _
      $region24: #{_lambda_.1} parent=11 // pred_fallthru
        _
      // Predicated region
      $region25: #{_lambda_.1} parent=11 // pred_check
        %p187 = pneg %p137
      $region26: #{_lambda_.1} parent=11 // pred_check_branch
        %189 = sbr.rel (%p187) target = $region28
      $region27: #{_lambda_.1} parent=11 // pred_region
        _
      $region28: #{_lambda_.1} parent=11 // pred_fallthru
        _
    $region12: #{_lambda_.1} parent=5 // pred_fallthru
      _
    %p190 = scmp.lt.s32.totalorder %s13, 8
    // Predicated region
    $region29: #{_lambda_.1} parent=5 // pred_check
      %p191 = pneg %p190
    $region30: #{_lambda_.1} parent=5 // pred_check_branch
      %193 = sbr.rel (%p191) target = $region32
    $region31: #{_lambda_.1} parent=5 // pred_region
      // Predicated region
      $region33: #{_lambda_.1} parent=31 // pred_check
        %p194 = pneg %p47
      $region34: #{_lambda_.1} parent=31 // pred_check_branch
        %196 = sbr.rel (%p194) target = $region36
      $region35: #{_lambda_.1} parent=31 // pred_region
        %s197 = smul.u32 8, %s21
        %p198 = scmp.lt.s32.totalorder %s20, 1
        %s199 = scalar_select %p198, %s20, 1
        %p200 = scmp.lt.s32.totalorder %s197, 31
        %s201 = scalar_select %p200, %s197, 31
        %s202 = smul.addr %s199, 32
        %s203 = sadd.s32 %s201, %s202
        %s204 = smul.addr %s203, 4
        %s205 = scalar_lea.vmem %s0, %s204
        %s206 = smul.u32 8, %s21
      $region36: #{_lambda_.1} parent=31 // pred_fallthru
        _
    $region32: #{_lambda_.1} parent=5 // pred_fallthru
      _
    %p207 = scmp.le.s32.totalorder 1, %s13
    %p208 = scmp.lt.s32.totalorder %s13, 9
    %p209 = pnand %p207, %p208
    %p210 = pneg %p209
    // Predicated region
    $region37: #{_lambda_.1} parent=5 // pred_check
      _
    $region38: #{_lambda_.1} parent=5 // pred_check_branch
      %212 = sbr.rel (%p209) target = $region40
    $region39: #{_lambda_.1} parent=5 // pred_region
      %s213 = ssub.s32 %s13, 1
      %s214 = smul.u32 8, %s23
      %p215 = scmp.lt.s32.totalorder %s22, 1
      %s216 = scalar_select %p215, %s22, 1
      %p217 = scmp.lt.s32.totalorder %s214, 31
      %s218 = scalar_select %p217, %s214, 31
      %s219 = smul.addr %s216, 32
      %s220 = sadd.s32 %s218, %s219
      %s221 = smul.addr %s220, 4
      %s222 = scalar_lea.vmem %s0, %s221
      %p223 = pneg %p53
      %p224 = pneg %p50
      %p225 = pneg %p74
      %p226 = pneg %p71
      %p227 = pneg %p95
      %p228 = pneg %p92
      %p229 = pneg %p116
      %p230 = pneg %p113
      %p231 = pneg %p137
      %p232 = pneg %p134
      %p233 = pneg %p163
      %p234 = pneg %p160
      %p235 = scmp.lt.s32.totalorder %s22, 1
      %s236 = scalar_select %p235, %s22, 1
      %s237 = smul.addr %s236, 8
      %s238 = scalar_lea.vmem %s5, %s237
      %s239 = smul.u32 8, %s23
      %p240 = scmp.lt.s32.totalorder %s22, 1
      %s241 = scalar_select %p240, %s22, 1
      %p242 = scmp.lt.s32.totalorder %s239, 31
      %s243 = scalar_select %p242, %s239, 31
      %s244 = smul.addr %s241, 32
      %s245 = sadd.s32 %s243, %s244
      %s246 = smul.addr %s245, 4
      %s247 = scalar_lea.vmem %s0, %s246
      %s248 = smul.u32 8, %s23
      %p249 = scmp.lt.s32.totalorder %s22, 1
      %s250 = scalar_select %p249, %s22, 1
      %s251 = smul.addr %s250, 8
      %s252 = scalar_lea.vmem %s5, %s251
      %p254 = scmp.eq.s32.totalorder %s23, 0
      // Predicated region
      $region41: #{_lambda_.1} parent=39 // pred_check
        %p255 = pneg %p254
      $region42: #{_lambda_.1} parent=39 // pred_check_branch
        %257 = sbr.rel (%p255) target = $region44
      $region43: #{_lambda_.1} parent=39 // pred_region
        %vm258 = vcmask 253952
        %259 = vst.msk [vmem:[#allocation2] sm:$0x1] %vm258, 0.0
      $region44: #{_lambda_.1} parent=39 // pred_fallthru
        _
      %v260 = vld [vmem:[%s247] sm:$0xf]
      %v261 = vld [vmem:[%s247 + $0x4] sm:$0xf]
      %v262 = vld [vmem:[%s247 + $0x8] sm:$0xf]
      %v263 = vld [vmem:[%s247 + $0xc] sm:$0xf]
      %v264 = vld [vmem:[%s247 + $0x10] sm:$0xf]
      %v265 = vld [vmem:[%s247 + $0x14] sm:$0xf]
      %v266 = vld [vmem:[%s247 + $0x18] sm:$0xf]
      %v267 = vld [vmem:[%s247 + $0x1c] sm:$0xf]
      %v268 = vld [vmem:[%s1] sm:$0xf]
      %v269 = vld [vmem:[%s1 + $0x4] sm:$0xf]
      %v270 = vld [vmem:[%s1 + $0x8] sm:$0xf]
      %v271 = vld [vmem:[%s1 + $0xc] sm:$0xf]
      %v272 = vld [vmem:[%s2] sm:$0x1]
      %v274 = vperm.slane %v272, 0
      %v284 = vunpack.c.l.b16 %v260
      %v285 = vunpack.c.l.b16 %v261
      %v286 = vunpack.c.l.b16 %v262
      %v287 = vunpack.c.l.b16 %v263
      %v288 = vunpack.c.l.b16 %v264
      %v289 = vunpack.c.l.b16 %v265
      %v290 = vunpack.c.l.b16 %v266
      %v291 = vunpack.c.l.b16 %v267
      %v292 = vpack.c.b16 %v285, %v284
      %v293 = vpack.c.b16 %v287, %v286
      %v294 = vpack.c.b16 %v289, %v288
      %v295 = vpack.c.b16 %v291, %v290
      %v300 = vunpack.c.l.b16 %v268
      %v301 = vunpack.c.l.b16 %v269
      %v302 = vunpack.c.l.b16 %v270
      %v303 = vunpack.c.l.b16 %v271
      %v304 = vpack.c.b16 %v301, %v300
      %v305 = vpack.c.b16 %v303, %v302
      %vm308 = vcmask 261120
      %v310 = vsel %vm308, %v292, 0
      %v313 = vsel %vm308, %v293, 0
      %v316 = vsel %vm308, %v294, 0
      %v319 = vsel %vm308, %v295, 0
      %321 = vmatpush.bf16.msra.mxu0 0
      %322 = vmatpush.bf16.msra.mxu0 0
      %323 = vmatpush.bf16.msra.mxu0 0
      %324 = vmatpush.bf16.msra.mxu0 0
      %325 = vmatpush.bf16.msra.mxu0 0
      %326 = vmatpush.bf16.msra.mxu0 0
      %327 = vmatpush.bf16.msra.mxu0 %v305
      %328 = vmatpush.bf16.msra.mxu0 %v304
      %329 = vmatmul.bf16.gmra.mxu0 %v310
      %v330 = vpop.f32.mrf.mxu0
      %v331 = vadd.f32 %v274, %v330
      %v332 = vpop.f32.mrf.mxu0
      %v333 = vadd.f32 %v274, %v332
      %334 = vmatmul.bf16.gmra.mxu0 %v313
      %v335 = vpop.f32.mrf.mxu0
      %v336 = vadd.f32 %v274, %v335
      %v337 = vpop.f32.mrf.mxu0
      %v338 = vadd.f32 %v274, %v337
      %339 = vmatmul.bf16.gmra.mxu0 %v316
      %v340 = vpop.f32.mrf.mxu0
      %v341 = vadd.f32 %v274, %v340
      %v342 = vpop.f32.mrf.mxu0
      %v343 = vadd.f32 %v274, %v342
      %344 = vmatmul.bf16.gmra.mxu0 %v319
      %v345 = vpop.f32.mrf.mxu0
      %v346 = vadd.f32 %v274, %v345
      %v347 = vpop.f32.mrf.mxu0
      %v348 = vadd.f32 %v274, %v347
      %349 = vdwg.mxu0
      %v350 = vmax.f32 %v331, 0.0
      %v351 = vmax.f32 %v333, 0.0
      %v352 = vmax.f32 %v336, 0.0
      %v353 = vmax.f32 %v338, 0.0
      %v354 = vmax.f32 %v341, 0.0
      %v355 = vmax.f32 %v343, 0.0
      %v356 = vmax.f32 %v346, 0.0
      %v357 = vmax.f32 %v348, 0.0
      %v358 = vld [vmem:[#allocation2] sm:$0x1]
      %v359 = vsel %vm308, %v350, 0.0
      %v360 = vsel %vm308, %v351, 0.0
      %v361 = vadd.f32 %v359, %v360
      %v362 = vsel %vm308, %v352, 0.0
      %v363 = vadd.f32 %v361, %v362
      %v364 = vsel %vm308, %v353, 0.0
      %v365 = vadd.f32 %v363, %v364
      %v366 = vsel %vm308, %v354, 0.0
      %v367 = vadd.f32 %v365, %v366
      %v368 = vsel %vm308, %v355, 0.0
      %v369 = vadd.f32 %v367, %v368
      %v370 = vsel %vm308, %v356, 0.0
      %v371 = vadd.f32 %v369, %v370
      %v372 = vsel %vm308, %v357, 0.0
      %v373 = vadd.f32 %v371, %v372
      %v374 = vrot.slane %v373, 4
      %v375 = vadd.f32 %v373, %v374
      %v376 = vrot.slane %v375, 2
      %v377 = vadd.f32 %v375, %v376
      %v378 = vrot.slane %v377, 1
      %v379 = vadd.f32 %v377, %v378
      %v380 = vadd.f32 %v358, %v379
      %vm381 = vcmask 253952
      %382 = vst.msk [vmem:[#allocation2] sm:$0x1] %vm381, %v380
      %p383 = scmp.eq.s32.totalorder %s23, 3
      // Predicated region
      $region45: #{_lambda_.1} parent=39 // pred_check
        %p384 = pneg %p383
      $region46: #{_lambda_.1} parent=39 // pred_check_branch
        %386 = sbr.rel (%p384) target = $region48
      $region47: #{_lambda_.1} parent=39 // pred_region
        %v387 = vld [vmem:[#allocation2] sm:$0x1]
        %v388 = vmul.f32 %v387, 0.00390625
        %v389 = vld [vmem:[%s3] sm:$0x1]
        %v390 = vmul.f32 %v388, %v389
        %v391 = vsel %vm381, %v390, 0.0
        %392 = vadd.xlane.f32.xlu0 %v391
        %v393 = vpop.xlane.xlu0 %392
        %v394 = vld [vmem:[#allocation3] sm:$0x1]
        %v395 = vadd.f32 %v393, %v394
        %s397 = vtos %v395
        %v398 = vstv %s397
        %400 = vst [vmem:[%s252] sm:$0xff] %v398
      $region48: #{_lambda_.1} parent=39 // pred_fallthru
        _
      %p401 = scmp.lt.s32.totalorder %s22, 1
      %s402 = scalar_select %p401, %s22, 1
      %s403 = smul.addr %s402, 8
      %s404 = scalar_lea.vmem %s5, %s403
      // Predicated region
      $region49: #{_lambda_.1} parent=39 // pred_check
        %p405 = pneg %p160
      $region50: #{_lambda_.1} parent=39 // pred_check_branch
        %407 = sbr.rel (%p405) target = $region52
      $region51: #{_lambda_.1} parent=39 // pred_region
        _
      $region52: #{_lambda_.1} parent=39 // pred_fallthru
        _
    $region40: #{_lambda_.1} parent=5 // pred_fallthru
      _
    %p408 = scmp.le.s32.totalorder 2, %s13
    // Predicated region
    $region53: #{_lambda_.1} parent=5 // pred_check
      %p409 = pneg %p408
    $region54: #{_lambda_.1} parent=5 // pred_check_branch
      %411 = sbr.rel (%p409) target = $region56
    $region55: #{_lambda_.1} parent=5 // pred_region
      %s412 = ssub.s32 %s13, 2
      // Predicated region
      $region57: #{_lambda_.1} parent=55 // pred_check
        %p413 = pneg %p166
      $region58: #{_lambda_.1} parent=55 // pred_check_branch
        %415 = sbr.rel (%p413) target = $region60
      $region59: #{_lambda_.1} parent=55 // pred_region
        %p416 = scmp.lt.s32.totalorder %s24, 1
        %s417 = scalar_select %p416, %s24, 1
        %s418 = smul.addr %s417, 8
        %s419 = scalar_lea.vmem %s5, %s418
      $region60: #{_lambda_.1} parent=55 // pred_fallthru
        _
    $region56: #{_lambda_.1} parent=5 // pred_fallthru
      _
  $region6: #{_lambda_.1} parent=0 // loop_footer
    %s17 = sadd.s32 1, %s13
  $region7: #{_lambda_.1} parent=0 // loop_footer_branch
    %12 = sbr.rel target = $region3
  $region8: #{_lambda_.1} parent=0 // loop_exit
    _

</llo_original>
